<compile_context>
chip_gen: v5e
topology: v5e:2x2
jax: 0.10.0
libtpu: 0.0.40
codegen_flags: <defaults>
</compile_context>

<pallas_src>
import functools

import jax
import jax.numpy as jnp
from jax.experimental import pallas as pl
from jax.experimental.pallas import tpu as pltpu


_LANES = 128
_TARGET_ROWS = 2048            # up to 2048*128 = 256K pixels per grid step


def _tensorcore_splits():
    """Megacore sharding only exists on v7x (2 TensorCores per chip)."""
    try:
        kind = jax.devices()[0].device_kind.lower()
        if "v7" in kind:
            return 2
    except Exception:
        pass
    return 1


def _vmem_budget_bytes():
    """Double-buffered working-set budget, derated per TPU generation."""
    try:
        cap = int(pltpu.get_tpu_info().vmem_capacity_bytes)
    except Exception:
        cap = 64 * 1024 * 1024          # conservative: v7x physical VMEM
    return int(min(cap // 2 - 4 * 1024 * 1024, 28 * 1024 * 1024))


def _focal_kernel(x_ref, tgt_ref, out_ref, *, smooth, hw, tile_rows,
                  tiles_per_split, need_mask):
    s = pl.program_id(0)        # TensorCore split
    nb = pl.program_id(1)       # batch block
    t = pl.program_id(2)        # row tile within this split

    # The output block is this split's accumulator; zero it once.
    @pl.when((nb == 0) & (t == 0))
    def _():
        out_ref[...] = jnp.zeros_like(out_ref)

    x = x_ref[...].astype(jnp.float32)            # (bn, C, tile_rows, 128)
    tgt = tgt_ref[...].astype(jnp.int32)          # (bn, tile_rows, 128)
    C = x.shape[1]

    # Softmax over the class axis (a leading axis -> pure VPU reductions).
    m = jnp.max(x, axis=1)                        # (bn, rows, 128)
    e = jnp.exp(x - m[:, None])                   # (bn, C, rows, 128)
    denom = jnp.sum(e, axis=1)                    # (bn, rows, 128)

    tgt_c = jnp.clip(tgt, 0, C - 1)
    cls_ids = jax.lax.broadcasted_iota(jnp.int32, x.shape, 1)
    e_t = jnp.sum(jnp.where(cls_ids == tgt_c[:, None], e, 0.0), axis=1)

    # Approximate reciprocal on the EUP slot + one Newton refinement step.
    r = pl.reciprocal(denom, approx=True)
    r = r * (2.0 - denom * r)
    pt = e_t * r + smooth
    loss = -(1.0 - pt) * jnp.log(pt)              # (bn, rows, 128)

    if need_mask:
        # Mask padded pixels, the ragged last row-tile and (for an odd tile
        # count) the duplicated clamped tile of the second split — BEFORE
        # accumulation, so garbage/NaN lanes never propagate.
        logical_tile = s * tiles_per_split + t
        row = logical_tile * tile_rows + jax.lax.broadcasted_iota(
            jnp.int32, loss.shape, 1)
        lane = jax.lax.broadcasted_iota(jnp.int32, loss.shape, 2)
        loss = jnp.where(row * _LANES + lane < hw, loss, 0.0)

    out_ref[...] += jnp.sum(loss, axis=0)         # reduce bn -> (rows, 128), VPU


def focal_loss_pallas(logits, targets, smooth=0.0001):
    """logits: [N, C, H, W] (f32/bf16); targets: [N, H, W] or [N,1,H,W] int ids."""
    if targets.ndim == 4 and targets.shape[1] == 1:
        targets = targets[:, 0]
    # Keep narrow integer target dtypes as-is (no int32 inflation in HBM).
    if (not jnp.issubdtype(targets.dtype, jnp.integer)
            or targets.dtype.itemsize > 4):
        targets = targets.astype(jnp.int32)

    N, C, H, W = logits.shape
    HW = H * W
    R = pl.cdiv(HW, _LANES)
    HW_pad = R * _LANES

    x = logits.reshape(N, C, HW)
    tg = targets.reshape(N, HW)
    if HW_pad != HW:
        # Rare fallback (HW not a multiple of 128): pad the pixel axis; padded
        # pixels are masked inside the kernel.
        x = jnp.pad(x, ((0, 0), (0, 0), (0, HW_pad - HW)))
        tg = jnp.pad(tg, ((0, 0), (0, HW_pad - HW)))
    x = x.reshape(N, C, R, _LANES)
    tg = tg.reshape(N, R, _LANES)

    # ---- generation-aware tile sizing -------------------------------------
    budget = _vmem_budget_bytes()
    row_in = C * _LANES * x.dtype.itemsize + _LANES * tg.dtype.itemsize
    row_out = _LANES * 4

    def ws_bytes(bn_, rows_):   # double-buffered inputs + output accumulator
        return 2 * bn_ * rows_ * row_in + 2 * rows_ * row_out

    if R <= _TARGET_ROWS and ws_bytes(1, R) <= budget:
        tile_rows = R                              # full-dim block (always legal)
        bn = max(1, min(N, _TARGET_ROWS // max(R, 1)))
        while bn > 1 and ws_bytes(bn, tile_rows) > budget:
            bn -= 1
        while N % bn:                              # bn must divide N
            bn -= 1
    else:
        bn = 1
        max_rows = max(8, budget // (2 * row_in + 2 * row_out))
        tile_rows = max(8, (min(_TARGET_ROWS, max_rows) // 8) * 8)
        tile_rows = min(tile_rows, pl.cdiv(R, 8) * 8)

    n_row_blocks = pl.cdiv(R, tile_rows)
    splits = min(_tensorcore_splits(), n_row_blocks)
    tiles_per_split = pl.cdiv(n_row_blocks, splits)
    grid = (splits, N // bn, tiles_per_split)
    need_mask = splits * tiles_per_split * tile_rows * _LANES != HW

    def x_map(s, nb, t):
        rb = jnp.minimum(s * tiles_per_split + t, n_row_blocks - 1)
        return (nb, 0, rb, 0)

    def t_map(s, nb, t):
        rb = jnp.minimum(s * tiles_per_split + t, n_row_blocks - 1)
        return (nb, rb, 0)

    kernel = functools.partial(
        _focal_kernel, smooth=float(smooth), hw=HW, tile_rows=tile_rows,
        tiles_per_split=tiles_per_split, need_mask=need_mask)

    n_px = N * HW
    cost = pl.CostEstimate(
        flops=int((6 * C + 10) * n_px),
        transcendentals=int((C + 2) * n_px),
        bytes_accessed=int(x.size * x.dtype.itemsize
                           + tg.size * tg.dtype.itemsize
                           + splits * tile_rows * _LANES * 4))

    partial_sums = pl.pallas_call(
        kernel,
        out_shape=jax.ShapeDtypeStruct((splits, tile_rows, _LANES), jnp.float32),
        grid_spec=pltpu.PrefetchScalarGridSpec(
            num_scalar_prefetch=0,
            grid=grid,
            in_specs=[
                pl.BlockSpec((bn, C, tile_rows, _LANES), x_map),
                pl.BlockSpec((bn, tile_rows, _LANES), t_map),
            ],
            out_specs=pl.BlockSpec((None, tile_rows, _LANES),
                                   lambda s, nb, t: (s, 0, 0)),
        ),
        compiler_params=pltpu.CompilerParams(
            dimension_semantics=("parallel", "arbitrary", "arbitrary"),
            vmem_limit_bytes=int(budget + 8 * 1024 * 1024),
        ),
        cost_estimate=cost,
    )(x, tg)

    # Single cross-lane reduce + normalization outside the kernel.
    return jnp.sum(partial_sums) / jnp.float32(N * HW)


def focal_loss_ref(logits, targets, smooth=0.0001):
    """Pure-JAX reference mirroring the PyTorch module."""
    if targets.ndim == 4 and targets.shape[1] == 1:
        targets = targets[:, 0]
    targets = targets.astype(jnp.int32)
    num_classes = logits.shape[1]
    probs = jax.nn.softmax(logits.astype(jnp.float32), axis=1)
    targets = jnp.clip(targets, 0, num_classes - 1)
    onehot = jax.nn.one_hot(targets, num_classes, axis=1, dtype=jnp.float32)
    pt = jnp.sum(probs * onehot, axis=1) + smooth
    return jnp.mean(-(1.0 - pt) * jnp.log(pt))


if __name__ == "__main__":
    key = jax.random.PRNGKey(0)
    k1, k2 = jax.random.split(key)

    N, C, H, W = 2, 4, 16, 16
    logits = jax.random.normal(k1, (N, C, H, W), dtype=jnp.float32)
    targets = jax.random.randint(k2, (N, H, W), 0, C, dtype=jnp.int32)

    out = focal_loss_pallas(logits, targets)
    out = jax.block_until_ready(out)

    ref = focal_loss_ref(logits, targets)
    assert jnp.allclose(out, ref, rtol=2e-5, atol=1e-6), (out, ref)

    print("KERNEL_OK")
</pallas_src>

<mosaic_0001>
module attributes {stable_mosaic.version = 11 : i64} {
  func.func @_focal_kernel(%arg0: i32, %arg1: i32, %arg2: i32, %arg3: memref<2x4x2x128xf32, #tpu.memory_space<vmem>>, %arg4: memref<2x2x128xi32, #tpu.memory_space<vmem>>, %arg5: memref<1x2x128xf32, #tpu.memory_space<vmem>>) attributes {dimension_semantics = [#tpu.dimension_semantics<parallel>, #tpu.dimension_semantics<arbitrary>, #tpu.dimension_semantics<arbitrary>], iteration_bounds = array<i64: 1, 1, 1>, scalar_prefetch = 0 : i64, scratch_operands = 0 : i64, tpu.core_type = #tpu.core_type<tc>, window_params = [{transform_indices = @transform_0, window_bounds = array<i64: 2, 4, 2, 128>}, {transform_indices = @transform_1, window_bounds = array<i64: 2, 2, 128>}, {transform_indices = @transform_2, window_bounds = array<i64: 1, 2, 128>}]} {
    %c0_i32 = arith.constant 0 : i32
    %0 = arith.cmpi eq, %arg1, %c0_i32 : i32
    %c0_i32_0 = arith.constant 0 : i32
    %1 = arith.cmpi eq, %arg2, %c0_i32_0 : i32
    %2 = arith.andi %0, %1 : i1
    %3 = arith.extui %2 : i1 to i32
    %c0_i32_1 = arith.constant 0 : i32
    %4 = arith.cmpi ne, %3, %c0_i32_1 : i32
    scf.if %4 {
      %cst_23 = arith.constant 0.000000e+00 : f32
      %45 = vector.broadcast %cst_23 : f32 to vector<2x128xf32>
      %c0_24 = arith.constant 0 : index
      %c0_25 = arith.constant 0 : index
      %c0_26 = arith.constant 0 : index
      %46 = vector.load %arg5[%c0_24, %c0_25, %c0_26] : memref<1x2x128xf32, #tpu.memory_space<vmem>>, vector<1x2x128xf32>
      %47 = vector.shape_cast %46 : vector<1x2x128xf32> to vector<2x128xf32>
      %48 = vector.shape_cast %45 : vector<2x128xf32> to vector<1x2x128xf32>
      tpu.vector_store %arg5[%c0_24, %c0_25, %c0_26], %48 {strides = array<i32>} : memref<1x2x128xf32, #tpu.memory_space<vmem>>, vector<1x2x128xf32>,
    } else {
    }
    %c0 = arith.constant 0 : index
    %c0_2 = arith.constant 0 : index
    %c0_3 = arith.constant 0 : index
    %c0_4 = arith.constant 0 : index
    %5 = vector.load %arg3[%c0, %c0_2, %c0_3, %c0_4] : memref<2x4x2x128xf32, #tpu.memory_space<vmem>>, vector<2x4x2x128xf32>
    %c0_5 = arith.constant 0 : index
    %c0_6 = arith.constant 0 : index
    %c0_7 = arith.constant 0 : index
    %6 = vector.load %arg4[%c0_5, %c0_6, %c0_7] : memref<2x2x128xi32, #tpu.memory_space<vmem>>, vector<2x2x128xi32>
    %cst = arith.constant dense<0xFF800000> : vector<2x2x128xf32>
    %7 = vector.multi_reduction <maximumf>, %5, %cst [1] : vector<2x4x2x128xf32> to vector<2x2x128xf32>
    %8 = vector.shape_cast %7 : vector<2x2x128xf32> to vector<2x1x2x128xf32>
    %9 = vector.broadcast %8 : vector<2x1x2x128xf32> to vector<2x4x2x128xf32>
    %10 = arith.subf %5, %9 : vector<2x4x2x128xf32>
    %11 = math.exp %10 : vector<2x4x2x128xf32>
    %cst_8 = arith.constant dense<0.000000e+00> : vector<2x2x128xf32>
    %12 = vector.multi_reduction <add>, %11, %cst_8 [1] : vector<2x4x2x128xf32> to vector<2x2x128xf32>
    %c0_i32_9 = arith.constant 0 : i32
    %c3_i32 = arith.constant 3 : i32
    %13 = vector.broadcast %c0_i32_9 : i32 to vector<2x2x128xi32>
    %14 = arith.maxsi %13, %6 : vector<2x2x128xi32>
    %15 = vector.broadcast %c3_i32 : i32 to vector<2x2x128xi32>
    %16 = arith.minsi %15, %14 : vector<2x2x128xi32>
    %17 = tpu.iota {dimensions = array<i32: 1>} : vector<2x4x2x128xi32>
    %18 = vector.shape_cast %16 : vector<2x2x128xi32> to vector<2x1x2x128xi32>
    %19 = vector.broadcast %18 : vector<2x1x2x128xi32> to vector<2x4x2x128xi32>
    %20 = arith.cmpi eq, %17, %19 : vector<2x4x2x128xi32>
    %cst_10 = arith.constant 0.000000e+00 : f32
    %21 = vector.broadcast %cst_10 : f32 to vector<2x4x2x128xf32>
    %22 = arith.select %20, %11, %21 : vector<2x4x2x128xi1>, vector<2x4x2x128xf32>
    %cst_11 = arith.constant dense<0.000000e+00> : vector<2x2x128xf32>
    %23 = vector.multi_reduction <add>, %22, %cst_11 [1] : vector<2x4x2x128xf32> to vector<2x2x128xf32>
    %24 = tpu.reciprocal %12 {approx = true} : vector<2x2x128xf32> -> vector<2x2x128xf32>
    %25 = arith.mulf %12, %24 : vector<2x2x128xf32>
    %cst_12 = arith.constant 2.000000e+00 : f32
    %26 = vector.broadcast %cst_12 : f32 to vector<2x2x128xf32>
    %27 = arith.subf %26, %25 : vector<2x2x128xf32>
    %28 = arith.mulf %24, %27 : vector<2x2x128xf32>
    %29 = arith.mulf %23, %28 : vector<2x2x128xf32>
    %cst_13 = arith.constant 9.99999974E-5 : f32
    %30 = vector.broadcast %cst_13 : f32 to vector<2x2x128xf32>
    %31 = arith.addf %29, %30 : vector<2x2x128xf32>
    %cst_14 = arith.constant 1.000000e+00 : f32
    %32 = vector.broadcast %cst_14 : f32 to vector<2x2x128xf32>
    %33 = arith.subf %32, %31 : vector<2x2x128xf32>
    %cst_15 = arith.constant 0.000000e+00 : f32
    %34 = vector.broadcast %cst_15 : f32 to vector<2x2x128xf32>
    %35 = arith.subf %34, %33 : vector<2x2x128xf32>
    %36 = math.log %31 : vector<2x2x128xf32>
    %37 = arith.mulf %35, %36 : vector<2x2x128xf32>
    %c0_16 = arith.constant 0 : index
    %c0_17 = arith.constant 0 : index
    %c0_18 = arith.constant 0 : index
    %38 = vector.load %arg5[%c0_16, %c0_17, %c0_18] : memref<1x2x128xf32, #tpu.memory_space<vmem>>, vector<1x2x128xf32>
    %39 = vector.shape_cast %38 : vector<1x2x128xf32> to vector<2x128xf32>
    %cst_19 = arith.constant dense<0.000000e+00> : vector<2x128xf32>
    %40 = vector.multi_reduction <add>, %37, %cst_19 [0] : vector<2x2x128xf32> to vector<2x128xf32>
    %41 = arith.addf %39, %40 : vector<2x128xf32>
    %c0_20 = arith.constant 0 : index
    %c0_21 = arith.constant 0 : index
    %c0_22 = arith.constant 0 : index
    %42 = vector.load %arg5[%c0_20, %c0_21, %c0_22] : memref<1x2x128xf32, #tpu.memory_space<vmem>>, vector<1x2x128xf32>
    %43 = vector.shape_cast %42 : vector<1x2x128xf32> to vector<2x128xf32>
    %44 = vector.shape_cast %41 : vector<2x128xf32> to vector<1x2x128xf32>
    tpu.vector_store %arg5[%c0_20, %c0_21, %c0_22], %44 {strides = array<i32>} : memref<1x2x128xf32, #tpu.memory_space<vmem>>, vector<1x2x128xf32>,
    return
  }
  func.func @transform_0(%arg0: i32, %arg1: i32, %arg2: i32) -> (i32, i32, i32, i32) {
    %c1_i32 = arith.constant 1 : i32
    %0 = arith.muli %arg0, %c1_i32 : i32
    %1 = arith.addi %0, %arg2 : i32
    %c0_i32 = arith.constant 0 : i32
    %2 = arith.minsi %1, %c0_i32 : i32
    %c0_i32_0 = arith.constant 0 : i32
    %c0_i32_1 = arith.constant 0 : i32
    %c0_i32_2 = arith.constant 0 : i32
    return %arg1, %c0_i32_0, %2, %c0_i32_1 : i32, i32, i32, i32
  }
  func.func @transform_1(%arg0: i32, %arg1: i32, %arg2: i32) -> (i32, i32, i32) {
    %c1_i32 = arith.constant 1 : i32
    %0 = arith.muli %arg0, %c1_i32 : i32
    %1 = arith.addi %0, %arg2 : i32
    %c0_i32 = arith.constant 0 : i32
    %2 = arith.minsi %1, %c0_i32 : i32
    %c0_i32_0 = arith.constant 0 : i32
    %c0_i32_1 = arith.constant 0 : i32
    return %arg1, %2, %c0_i32_0 : i32, i32, i32
  }
  func.func @transform_2(%arg0: i32, %arg1: i32, %arg2: i32) -> (i32, i32, i32) {
    %c0_i32 = arith.constant 0 : i32
    %c0_i32_0 = arith.constant 0 : i32
    %c0_i32_1 = arith.constant 0 : i32
    return %arg0, %c0_i32, %c0_i32_0 : i32, i32, i32
  }
}

</mosaic_0001>

<llo_original>
// kernel: tpu_custom_call.1
$region0: #{tpu_custom_call.1}
  #allocation0 [shape = 'u32[]', space=smem, size = 0x4, offset = 0x4, fixed_abs, tag = 'smem constant byte address 0x4 - core index']
  #allocation1 [shape = 'u32[72,128]{1,0:T(1,128)}', space=vmem, size = 0x9000, scoped, tag = 'internal scratch']
  %s0 = inlined_call_operand.hbm [shape: f32[2,4,2,128], index: 0, kind: input, shape index: {}]
  %s1 = inlined_call_operand.hbm [shape: s32[2,2,128], index: 1, kind: input, shape index: {}]
  %s2 = inlined_call_operand.hbm [shape: f32[1,2,128], index: 2, kind: output, shape index: {}]
  %s3 = sld [smem:[#allocation0]]
  $region30: #{tpu_custom_call.1} parent=0
    _
  %s5 = ssub.s32 1, %s3
  %s6 = scalar_select 0, %s5, %s3
  $region1: #{tpu_custom_call.1} parent=0
    #allocation2 [shape = 'u8[8192]{0}', space=vmem, size = 0x2000, scoped, tag = 'input window, operand 0, single buffered']
    #allocation3 [shape = 's32[1]{0}', space=sflag, size = 0x4, scoped, tag = 'scoped memory for tpu_custom_call.1']
    #allocation4 [shape = 's32[1]{0}', space=sflag, size = 0x4, scoped, tag = 'scoped memory for tpu_custom_call.1']
    #allocation5 [shape = 'u8[2048]{0}', space=vmem, size = 0x800, scoped, tag = 'input window, operand 1, single buffered']
    #allocation6 [shape = 's32[1]{0}', space=sflag, size = 0x4, scoped, tag = 'scoped memory for tpu_custom_call.1']
    #allocation7 [shape = 'u8[1024]{0}', space=vmem, size = 0x400, scoped, tag = 'output window, operand 0, single buffered']
    %7 = vsyncpa [#allocation3], 0
    %8 = vsyncpa [#allocation6], 0
    %9 = vsyncpa [#allocation4], 0
    // Predicated region
    $region2: #{tpu_custom_call.1} parent=1 // pred_check
      _
    $region3: #{tpu_custom_call.1} parent=1 // pred_check_branch
      %11 = sbr.rel (0) target = $region5
    $region4: #{tpu_custom_call.1} parent=1 // pred_region
      %s12 = sadd.s32 0, 0
      %p13 = scmp.lt.s32.totalorder %s12, 0
      %s14 = scalar_select %p13, %s12, 0
      %16 = vsyncadd [#allocation3], 0
      %s17 = smul.addr %s14, 2
      %s18 = scalar_lea.hbm %s0, %s17
      %s19 = sshll.u32 %s18, 4
      %s20 = int_to_ptr.hbm [resolvable:$true] %s19
      %s21 = sshll.u32 [#allocation2], 4
      %s22 = int_to_ptr.vmem [resolvable:$true] %s21
      %27 = dma.hbm_to_vmem [thread:$0]  %s20, 256, %s22, [#allocation3], 32, 32, 2
    $region5: #{tpu_custom_call.1} parent=1 // pred_fallthru
      _
    // Predicated region
    $region6: #{tpu_custom_call.1} parent=1 // pred_check
      _
    $region7: #{tpu_custom_call.1} parent=1 // pred_check_branch
      %29 = sbr.rel (0) target = $region9
    $region8: #{tpu_custom_call.1} parent=1 // pred_region
      %s30 = sadd.s32 0, 0
      %p31 = scmp.lt.s32.totalorder %s30, 0
      %s32 = scalar_select %p31, %s30, 0
      %34 = vsyncadd [#allocation6], 0
      %s35 = smul.addr %s32, 2
      %s36 = scalar_lea.hbm %s1, %s35
      %s37 = sshll.u32 %s36, 4
      %s38 = int_to_ptr.hbm [resolvable:$true] %s37
      %s39 = sshll.u32 [#allocation5], 4
      %s40 = int_to_ptr.vmem [resolvable:$true] %s39
      %45 = dma.hbm_to_vmem [thread:$0]  %s38, 64, %s40, [#allocation6], 32, 32, 2
    $region9: #{tpu_custom_call.1} parent=1 // pred_fallthru
      _
    // Predicated region
    $region10: #{tpu_custom_call.1} parent=1 // pred_check
      _
    $region11: #{tpu_custom_call.1} parent=1 // pred_check_branch
      %47 = sbr.rel (0) target = $region13
    $region12: #{tpu_custom_call.1} parent=1 // pred_region
      %49 = dma.done [#allocation3], 256
    $region13: #{tpu_custom_call.1} parent=1 // pred_fallthru
      _
    // Predicated region
    $region14: #{tpu_custom_call.1} parent=1 // pred_check
      _
    $region15: #{tpu_custom_call.1} parent=1 // pred_check_branch
      %51 = sbr.rel (0) target = $region17
    $region16: #{tpu_custom_call.1} parent=1 // pred_region
      %53 = dma.done [#allocation6], 64
    $region17: #{tpu_custom_call.1} parent=1 // pred_fallthru
      _
    %s54 = sadd.s32 0, 0
    %p55 = scmp.lt.s32.totalorder %s54, 0
    %s56 = scalar_select %p55, %s54, 0
    %s57 = sadd.s32 0, 0
    %p58 = scmp.lt.s32.totalorder %s57, 0
    %s59 = scalar_select %p58, %s57, 0
    %p60 = scmp.eq.s32.totalorder 0, 0
    %p61 = scmp.eq.s32.totalorder 0, 0
    %p62 = pnand %p60, %p61
    %p63 = pneg %p62
    // Predicated region
    $region18: #{tpu_custom_call.1} parent=1 // pred_check
      _
    $region19: #{tpu_custom_call.1} parent=1 // pred_check_branch
      %65 = sbr.rel (%p62) target = $region21
    $region20: #{tpu_custom_call.1} parent=1 // pred_region
      %66 = vst [vmem:[#allocation7] sm:$0x3] 0.0
    $region21: #{tpu_custom_call.1} parent=1 // pred_fallthru
      _
    %v67 = vld [vmem:[#allocation2] sm:$0x3]
    %v68 = vld [vmem:[#allocation2 + $0x2] sm:$0x3]
    %v69 = vld [vmem:[#allocation2 + $0x4] sm:$0x3]
    %v70 = vld [vmem:[#allocation2 + $0x6] sm:$0x3]
    %v71 = vld [vmem:[#allocation2 + $0x8] sm:$0x3]
    %v72 = vld [vmem:[#allocation2 + $0xa] sm:$0x3]
    %v73 = vld [vmem:[#allocation2 + $0xc] sm:$0x3]
    %v74 = vld [vmem:[#allocation2 + $0xe] sm:$0x3]
    %v75 = vld [vmem:[#allocation5] sm:$0x3]
    %v76 = vld [vmem:[#allocation5 + $0x2] sm:$0x3]
    %vm77 = vcmask 1041408
    %v78 = vsel %vm77, %v67, -inf
    %v79 = vsel %vm77, %v68, -inf
    %v80 = vsel %vm77, %v69, -inf
    %v81 = vmax.f32 %v78, %v80
    %v82 = vsel %vm77, %v70, -inf
    %v83 = vmax.f32 %v79, %v82
    %v84 = vmax.f32 %v81, %v83
    %v85 = vsel %vm77, %v71, -inf
    %v86 = vsel %vm77, %v72, -inf
    %v87 = vsel %vm77, %v73, -inf
    %v88 = vmax.f32 %v85, %v87
    %v89 = vsel %vm77, %v74, -inf
    %v90 = vmax.f32 %v86, %v89
    %v91 = vmax.f32 %v88, %v90
    %v92 = vsub.f32 %v67, %v84
    %v93 = vsub.f32 %v68, %v84
    %v94 = vsub.f32 %v69, %v84
    %v95 = vsub.f32 %v70, %v84
    %v96 = vsub.f32 %v71, %v91
    %v97 = vsub.f32 %v72, %v91
    %v98 = vsub.f32 %v73, %v91
    %v99 = vsub.f32 %v74, %v91
    %v100 = vmul.f32 %v92, 1.442695
    %v101 = vpow.pop %v100
    %v102 = vmul.f32 %v93, 1.442695
    %v103 = vpow.pop %v102
    %v104 = vmul.f32 %v94, 1.442695
    %v105 = vpow.pop %v104
    %v106 = vmul.f32 %v95, 1.442695
    %v107 = vpow.pop %v106
    %v108 = vmul.f32 %v96, 1.442695
    %v109 = vpow.pop %v108
    %v110 = vmul.f32 %v97, 1.442695
    %v111 = vpow.pop %v110
    %v112 = vmul.f32 %v98, 1.442695
    %v113 = vpow.pop %v112
    %v114 = vmul.f32 %v99, 1.442695
    %v115 = vpow.pop %v114
    %v116 = vsel %vm77, %v101, 0.0
    %v117 = vsel %vm77, %v103, 0.0
    %v118 = vadd.f32 %v116, %v117
    %v119 = vsel %vm77, %v105, 0.0
    %v120 = vadd.f32 %v118, %v119
    %v121 = vsel %vm77, %v107, 0.0
    %v122 = vadd.f32 %v120, %v121
    %v123 = vsel %vm77, %v109, 0.0
    %v124 = vsel %vm77, %v111, 0.0
    %v125 = vadd.f32 %v123, %v124
    %v126 = vsel %vm77, %v113, 0.0
    %v127 = vadd.f32 %v125, %v126
    %v128 = vsel %vm77, %v115, 0.0
    %v129 = vadd.f32 %v127, %v128
    %vm130 = vcmp.gt.s32.totalorder %v75, 0
    %v131 = vsel %vm130, %v75, 0
    %vm132 = vcmp.gt.s32.totalorder %v76, 0
    %v133 = vsel %vm132, %v76, 0
    %vm134 = vcmp.lt.s32.totalorder %v131, 3
    %v135 = vsel %vm134, %v131, 3
    %vm136 = vcmp.lt.s32.totalorder %v133, 3
    %v137 = vsel %vm136, %v133, 3
    %vm138 = vcmp.eq.s32.totalorder %v135, 0
    %vm139 = vcmp.eq.s32.totalorder %v135, 1
    %vm140 = vcmp.eq.s32.totalorder %v135, 2
    %vm141 = vcmp.eq.s32.totalorder %v135, 3
    %vm142 = vcmp.eq.s32.totalorder %v137, 0
    %vm143 = vcmp.eq.s32.totalorder %v137, 1
    %vm144 = vcmp.eq.s32.totalorder %v137, 2
    %vm145 = vcmp.eq.s32.totalorder %v137, 3
    %v146 = vsel %vm138, %v101, 0.0
    %v147 = vsel %vm139, %v103, 0.0
    %v148 = vsel %vm140, %v105, 0.0
    %v149 = vsel %vm141, %v107, 0.0
    %v150 = vsel %vm142, %v109, 0.0
    %v151 = vsel %vm143, %v111, 0.0
    %v152 = vsel %vm144, %v113, 0.0
    %v153 = vsel %vm145, %v115, 0.0
    %v154 = vsel %vm77, %v146, 0.0
    %v155 = vsel %vm77, %v147, 0.0
    %v156 = vadd.f32 %v154, %v155
    %v157 = vsel %vm77, %v148, 0.0
    %v158 = vadd.f32 %v156, %v157
    %v159 = vsel %vm77, %v149, 0.0
    %v160 = vadd.f32 %v158, %v159
    %v161 = vsel %vm77, %v150, 0.0
    %v162 = vsel %vm77, %v151, 0.0
    %v163 = vadd.f32 %v161, %v162
    %v164 = vsel %vm77, %v152, 0.0
    %v165 = vadd.f32 %v163, %v164
    %v166 = vsel %vm77, %v153, 0.0
    %v167 = vadd.f32 %v165, %v166
    %v168 = vrcp.pop %v122
    %v169 = vrcp.pop %v129
    %v170 = vmul.f32 %v122, %v168
    %v171 = vmul.f32 %v129, %v169
    %v172 = vsub.f32 2.0, %v170
    %v173 = vsub.f32 2.0, %v171
    %v174 = vmul.f32 %v168, %v172
    %v175 = vmul.f32 %v169, %v173
    %v176 = vmul.f32 %v160, %v174
    %v177 = vmul.f32 %v167, %v175
    %v178 = vadd.f32 %v176, 0.0001
    %v179 = vadd.f32 %v177, 0.0001
    %v180 = vsub.f32 1.0, %v178
    %v181 = vsub.f32 1.0, %v179
    %v182 = vsub.f32 0.0, %v180
    %v183 = vsub.f32 0.0, %v181
    %v184 = vlog2.pop %v178
    %v185 = vmul.f32 %v184, 0.6931472
    %v186 = vlog2.pop %v179
    %v187 = vmul.f32 %v186, 0.6931472
    %v188 = vmul.f32 %v182, %v185
    %v189 = vmul.f32 %v183, %v187
    %v190 = vld [vmem:[#allocation7] sm:$0x3]
    %v191 = vsel %vm77, %v188, 0.0
    %v192 = vsel %vm77, %v189, 0.0
    %v193 = vadd.f32 %v191, %v192
    %v194 = vadd.f32 %v190, %v193
    %195 = vst [vmem:[#allocation7] sm:$0x3] %v194
    // Predicated region
    $region22: #{tpu_custom_call.1} parent=1 // pred_check
      _
    $region23: #{tpu_custom_call.1} parent=1 // pred_check_branch
      %197 = sbr.rel (0) target = $region25
    $region24: #{tpu_custom_call.1} parent=1 // pred_region
      %199 = vsyncadd [#allocation4], 0
      %s201 = sshll.u32 [#allocation7], 4
      %s202 = int_to_ptr.vmem [resolvable:$true] %s201
      %s203 = sshll.u32 %s2, 4
      %s204 = int_to_ptr.hbm [resolvable:$true] %s203
      %206 = dma.vmem_to_hbm [thread:$0]  %s202, 32, %s204, [#allocation4]
    $region25: #{tpu_custom_call.1} parent=1 // pred_fallthru
      _
    // Predicated region
    $region26: #{tpu_custom_call.1} parent=1 // pred_check
      _
    $region27: #{tpu_custom_call.1} parent=1 // pred_check_branch
      %208 = sbr.rel (0) target = $region29
    $region28: #{tpu_custom_call.1} parent=1 // pred_region
      %210 = dma.done [#allocation4], 32
    $region29: #{tpu_custom_call.1} parent=1 // pred_fallthru
      _
    %211 = vsyncpa [#allocation3], 1
    %212 = vsyncpa [#allocation6], 1
    %213 = vsyncpa [#allocation4], 1

</llo_original>
